<compile_context>
chip_gen: v6e
topology: v6e:2x2x1
jax: 0.10.0
libtpu: 0.0.40
codegen_flags: <defaults>
</compile_context>

<pallas_src>
import math
from functools import partial

import jax
import jax.numpy as jnp
from jax.experimental import pallas as pl
from jax.experimental.pallas import tpu as pltpu


HIDDEN = [256, 128, 64, 32]
LANE = 128          # lane width / feature-dim padding granule
TILE_B = 1024       # batch-tile cap (amortizes ~0.35 us per-grid-step overhead)

# Row offsets of padded W2..W5 inside the (640, 128) weight slab.
# Padded input dims of layers 2..5 are [256, 128, 128, 128].
_SLAB_ROWS = [256, 128, 128, 128]
_SLAB_OFFS = [0, 256, 384, 512, 640]


def _round_up(x, m):
    return (x + m - 1) // m * m


def _cdiv(a, b):
    return -(-a // b)


def _batch_tiling(B, tile_cap=TILE_B):
    """Near-equal batch tiles: multiple of 16 rows (bf16 sublane packing),
    capped at tile_cap, and an even number (>=2) of grid steps whenever the
    batch is large enough so both v7x TensorCores get work."""
    b16 = _round_up(max(B, 1), 16)
    n = max(1, _cdiv(b16, tile_cap))
    if n == 1 and b16 >= 128:        # enough rows to be worth splitting
        n = 2
    if n > 1 and n % 2 == 1:         # even step count for 2-TC sharding
        n += 1
    tb = _round_up(_cdiv(b16, n), 16)
    n = _cdiv(b16, tb)
    return tb, tb * n


def qnetwork_kernel(x_ref, w1_ref, ws_ref, b_ref, out_ref, xp_ref):
    """One batch tile of the fused 5-layer MLP.

    x_ref  : (tb, S)    bf16  unpadded state features (S = real state_size)
    w1_ref : (128, 256) bf16  fc1 weights, zero-padded, lane-dense
    ws_ref : (640, 128) bf16  fc2|fc3|fc4|logits weights stacked along rows
    b_ref  : (8, 256)   f32   row k = bias of layer k+1, zero-padded
    out_ref: (tb, 128)  f32   lane-dense logits (real logits in lanes [:action_size])
    xp_ref : (tb, 128)  bf16  VMEM scratch: lane-padded input
    """
    s = x_ref.shape[1]

    # Pad the (tb, S) state block to lane-dense (tb, 128) in VMEM.
    # Re-zeroed every step -> safe under megacore-parallel grid sharding.
    xp_ref[...] = jnp.zeros_like(xp_ref)
    xp_ref[:, :s] = x_ref[...]

    b = b_ref[...]

    # fc1: (tb,128) @ (128,256)
    h = jnp.dot(xp_ref[...], w1_ref[...], preferred_element_type=jnp.float32)
    h = jnp.maximum(h + b[0:1, :], 0.0)

    # fc2: (tb,256) @ (256,128)
    h = jnp.dot(h.astype(jnp.bfloat16), ws_ref[_SLAB_OFFS[0]:_SLAB_OFFS[1], :],
                preferred_element_type=jnp.float32)
    h = jnp.maximum(h + b[1:2, :LANE], 0.0)

    # fc3: (tb,128) @ (128,128)
    h = jnp.dot(h.astype(jnp.bfloat16), ws_ref[_SLAB_OFFS[1]:_SLAB_OFFS[2], :],
                preferred_element_type=jnp.float32)
    h = jnp.maximum(h + b[2:3, :LANE], 0.0)

    # fc4: (tb,128) @ (128,128)
    h = jnp.dot(h.astype(jnp.bfloat16), ws_ref[_SLAB_OFFS[2]:_SLAB_OFFS[3], :],
                preferred_element_type=jnp.float32)
    h = jnp.maximum(h + b[3:4, :LANE], 0.0)

    # logits: (tb,128) @ (128,128)
    out = jnp.dot(h.astype(jnp.bfloat16), ws_ref[_SLAB_OFFS[3]:_SLAB_OFFS[4], :],
                  preferred_element_type=jnp.float32)
    out_ref[...] = (out + b[4:5, :LANE]).astype(out_ref.dtype)


@partial(jax.jit, static_argnames=("action_size", "tile_cap"))
def qnetwork_forward(x, w1, w_slab, bias_pack, *, action_size, tile_cap=TILE_B):
    """x: [B, state_size] f32/bf16. Returns [B, action_size] f32 Q-values."""
    B, S = x.shape
    tb, b_pad = _batch_tiling(B, tile_cap)

    x_bf16 = x.astype(jnp.bfloat16)
    if b_pad != B:
        x_bf16 = jnp.zeros((b_pad, S), jnp.bfloat16).at[:B].set(x_bf16)

    grid = (b_pad // tb,)
    in_specs = [
        # State block: batch-tiled, feature dim unpadded (== full array dim).
        pl.BlockSpec((tb, S), lambda i: (i, 0)),
        # Constant index_maps: weights/biases stay VMEM-resident across steps.
        pl.BlockSpec(w1.shape, lambda i: (0, 0)),
        pl.BlockSpec(w_slab.shape, lambda i: (0, 0)),
        pl.BlockSpec(bias_pack.shape, lambda i: (0, 0)),
    ]

    out_pad = pl.pallas_call(
        qnetwork_kernel,
        out_shape=jax.ShapeDtypeStruct((b_pad, LANE), jnp.float32),
        grid=grid,
        in_specs=in_specs,
        out_specs=pl.BlockSpec((tb, LANE), lambda i: (i, 0)),
        scratch_shapes=[pltpu.VMEM((tb, LANE), jnp.bfloat16)],
        compiler_params=pltpu.CompilerParams(
            dimension_semantics=("parallel",)),
    )(x_bf16, w1, w_slab, bias_pack)

    return out_pad[:B, :action_size]


def init_qnetwork_params(key, state_size, action_size):
    """torch.nn.Linear-style init (U[-1/sqrt(fan_in), +1/sqrt(fan_in)]).

    Returns:
      w1       : (128, 256) bf16 zero-padded fc1 weights ([in, out] layout).
      w_slab   : (640, 128) bf16, padded W2..W5 stacked along rows.
      bias_pack: (8, 256)   f32, row k = bias of layer k+1 (zero-padded).
      raw      : list of (W f32 [in, out], b f32 [out]) unpadded, for reference.
    """
    sizes = [state_size] + HIDDEN + [action_size]
    padded = [_round_up(s, LANE) for s in sizes]

    w_pads = []
    raw = []
    bias_pack = jnp.zeros((8, padded[1]), jnp.float32)   # widest bias = 256

    for i in range(len(sizes) - 1):
        fan_in, fan_out = sizes[i], sizes[i + 1]
        pin, pout = padded[i], padded[i + 1]
        key, kw, kb = jax.random.split(key, 3)
        bound = 1.0 / math.sqrt(fan_in)
        w = jax.random.uniform(kw, (fan_in, fan_out), jnp.float32, -bound, bound)
        b = jax.random.uniform(kb, (fan_out,), jnp.float32, -bound, bound)
        raw.append((w, b))
        w_pad = jnp.zeros((pin, pout), jnp.float32).at[:fan_in, :fan_out].set(w)
        w_pads.append(w_pad.astype(jnp.bfloat16))
        bias_pack = bias_pack.at[i, :fan_out].set(b)

    w1 = w_pads[0]                                  # (128, 256)
    w_slab = jnp.concatenate(w_pads[1:], axis=0)    # (640, 128)
    return w1, w_slab, bias_pack, raw


def reference_forward_bf16(x, w1, w_slab, bias_pack, action_size):
    """Same padded bf16 computation as the kernel, in plain JAX."""
    B, S = x.shape
    xp = jnp.zeros((B, w1.shape[0]), jnp.bfloat16).at[:, :S].set(
        x.astype(jnp.bfloat16))
    h = jnp.dot(xp, w1, preferred_element_type=jnp.float32) + bias_pack[0:1, :]
    h = jnp.maximum(h, 0.0)
    for k in range(4):
        w = w_slab[_SLAB_OFFS[k]:_SLAB_OFFS[k + 1], :]
        y = jnp.dot(h.astype(jnp.bfloat16), w,
                    preferred_element_type=jnp.float32) + bias_pack[k + 1:k + 2, :LANE]
        h = jnp.maximum(y, 0.0) if k < 3 else y
    return h[:, :action_size]


def reference_forward_f32(x, raw_params):
    """Unpadded full-f32 reference (checks that padding does not change results)."""
    h = x
    for (w, b) in raw_params[:-1]:
        h = jnp.maximum(h @ w + b[None, :], 0.0)
    w, b = raw_params[-1]
    return h @ w + b[None, :]


if __name__ == "__main__":
    # Banana-navigation-like sizes, kept small.
    state_size = 37
    action_size = 4
    batch = 2

    key = jax.random.PRNGKey(0)
    key, kx = jax.random.split(key)
    x = jax.random.normal(kx, (batch, state_size), dtype=jnp.float32)

    w1, w_slab, bias_pack, raw = init_qnetwork_params(key, state_size, action_size)

    out = qnetwork_forward(x, w1, w_slab, bias_pack, action_size=action_size)
    out = jax.block_until_ready(out)
    assert out.shape == (batch, action_size)

    # Exact-semantics check vs. an identical bf16 padded JAX computation.
    ref_bf16 = reference_forward_bf16(x, w1, w_slab, bias_pack, action_size)
    assert jnp.allclose(out, ref_bf16, atol=1e-3, rtol=1e-3)

    # Sanity check vs. unpadded f32 math (looser tolerance: weights are bf16).
    ref_f32 = reference_forward_f32(x, raw)
    assert jnp.allclose(out, ref_f32, atol=5e-2, rtol=5e-2)

    print("KERNEL_OK")
</pallas_src>

<mosaic_0001>
module attributes {stable_mosaic.version = 11 : i64} {
  func.func @qnetwork_kernel(%arg0: i32, %arg1: memref<16x37xbf16, #tpu.memory_space<vmem>>, %arg2: memref<128x256xbf16, #tpu.memory_space<vmem>>, %arg3: memref<640x128xbf16, #tpu.memory_space<vmem>>, %arg4: memref<8x256xf32, #tpu.memory_space<vmem>>, %arg5: memref<16x128xf32, #tpu.memory_space<vmem>>, %arg6: memref<16x128xbf16, #tpu.memory_space<vmem>>) attributes {dimension_semantics = [#tpu.dimension_semantics<parallel>], iteration_bounds = array<i64: 1>, scalar_prefetch = 0 : i64, scratch_operands = 1 : i64, tpu.core_type = #tpu.core_type<tc>, window_params = [{transform_indices = @transform_0, window_bounds = array<i64: 16, 37>}, {pipeline_mode = #tpu.pipeline_mode<synchronous>, transform_indices = @transform_1, window_bounds = array<i64: 128, 256>}, {pipeline_mode = #tpu.pipeline_mode<synchronous>, transform_indices = @transform_2, window_bounds = array<i64: 640, 128>}, {pipeline_mode = #tpu.pipeline_mode<synchronous>, transform_indices = @transform_3, window_bounds = array<i64: 8, 256>}, {transform_indices = @transform_4, window_bounds = array<i64: 16, 128>}]} {
    %cst = arith.constant 0.000000e+00 : bf16
    %0 = vector.broadcast %cst : bf16 to vector<16x128xbf16>
    %c0 = arith.constant 0 : index
    %c0_0 = arith.constant 0 : index
    %1 = vector.load %arg6[%c0, %c0_0] : memref<16x128xbf16, #tpu.memory_space<vmem>>, vector<16x128xbf16>
    tpu.vector_store %arg6[%c0, %c0_0], %0 {strides = array<i32>} : memref<16x128xbf16, #tpu.memory_space<vmem>>, vector<16x128xbf16>,
    %c0_1 = arith.constant 0 : index
    %c0_2 = arith.constant 0 : index
    %2 = vector.load %arg1[%c0_1, %c0_2] : memref<16x37xbf16, #tpu.memory_space<vmem>>, vector<16x37xbf16>
    %c0_3 = arith.constant 0 : index
    %c0_4 = arith.constant 0 : index
    %3 = vector.load %arg6[%c0_3, %c0_4] : memref<16x128xbf16, #tpu.memory_space<vmem>>, vector<16x37xbf16>
    tpu.vector_store %arg6[%c0_3, %c0_4], %2 {strides = array<i32>} : memref<16x128xbf16, #tpu.memory_space<vmem>>, vector<16x37xbf16>,
    %c0_5 = arith.constant 0 : index
    %c0_6 = arith.constant 0 : index
    %4 = vector.load %arg4[%c0_5, %c0_6] : memref<8x256xf32, #tpu.memory_space<vmem>>, vector<8x256xf32>
    %c0_7 = arith.constant 0 : index
    %c0_8 = arith.constant 0 : index
    %5 = vector.load %arg6[%c0_7, %c0_8] : memref<16x128xbf16, #tpu.memory_space<vmem>>, vector<16x128xbf16>
    %c0_9 = arith.constant 0 : index
    %c0_10 = arith.constant 0 : index
    %6 = vector.load %arg2[%c0_9, %c0_10] : memref<128x256xbf16, #tpu.memory_space<vmem>>, vector<128x256xbf16>
    %cst_11 = arith.constant dense<0.000000e+00> : vector<16x256xf32>
    %7 = tpu.matmul %5, %6, %cst_11 {dimension_numbers = #tpu.dot_dimension_numbers<[1], [0], [0], [1], [0, 0, 1, 1], [], []>} : vector<16x128xbf16>, vector<128x256xbf16>, vector<16x256xf32> -> vector<16x256xf32>
    %8 = vector.extract_strided_slice %4 {offsets = [0, 0], sizes = [1, 256], strides = [1, 1]} : vector<8x256xf32> to vector<1x256xf32>
    %9 = vector.broadcast %8 : vector<1x256xf32> to vector<16x256xf32>
    %10 = arith.addf %7, %9 : vector<16x256xf32>
    %cst_12 = arith.constant 0.000000e+00 : f32
    %11 = vector.broadcast %cst_12 : f32 to vector<16x256xf32>
    %12 = arith.maximumf %10, %11 : vector<16x256xf32>
    %13 = arith.truncf %12 : vector<16x256xf32> to vector<16x256xbf16>
    %c0_13 = arith.constant 0 : index
    %c0_14 = arith.constant 0 : index
    %14 = vector.load %arg3[%c0_13, %c0_14] : memref<640x128xbf16, #tpu.memory_space<vmem>>, vector<256x128xbf16>
    %cst_15 = arith.constant dense<0.000000e+00> : vector<16x128xf32>
    %15 = tpu.matmul %13, %14, %cst_15 {dimension_numbers = #tpu.dot_dimension_numbers<[1], [0], [0], [1], [0, 0, 1, 1], [], []>} : vector<16x256xbf16>, vector<256x128xbf16>, vector<16x128xf32> -> vector<16x128xf32>
    %16 = vector.extract_strided_slice %4 {offsets = [1, 0], sizes = [1, 128], strides = [1, 1]} : vector<8x256xf32> to vector<1x128xf32>
    %17 = vector.broadcast %16 : vector<1x128xf32> to vector<16x128xf32>
    %18 = arith.addf %15, %17 : vector<16x128xf32>
    %cst_16 = arith.constant 0.000000e+00 : f32
    %19 = vector.broadcast %cst_16 : f32 to vector<16x128xf32>
    %20 = arith.maximumf %18, %19 : vector<16x128xf32>
    %21 = arith.truncf %20 : vector<16x128xf32> to vector<16x128xbf16>
    %c256 = arith.constant 256 : index
    %c0_17 = arith.constant 0 : index
    %22 = vector.load %arg3[%c256, %c0_17] : memref<640x128xbf16, #tpu.memory_space<vmem>>, vector<128x128xbf16>
    %cst_18 = arith.constant dense<0.000000e+00> : vector<16x128xf32>
    %23 = tpu.matmul %21, %22, %cst_18 {dimension_numbers = #tpu.dot_dimension_numbers<[1], [0], [0], [1], [0, 0, 1, 1], [], []>} : vector<16x128xbf16>, vector<128x128xbf16>, vector<16x128xf32> -> vector<16x128xf32>
    %24 = vector.extract_strided_slice %4 {offsets = [2, 0], sizes = [1, 128], strides = [1, 1]} : vector<8x256xf32> to vector<1x128xf32>
    %25 = vector.broadcast %24 : vector<1x128xf32> to vector<16x128xf32>
    %26 = arith.addf %23, %25 : vector<16x128xf32>
    %cst_19 = arith.constant 0.000000e+00 : f32
    %27 = vector.broadcast %cst_19 : f32 to vector<16x128xf32>
    %28 = arith.maximumf %26, %27 : vector<16x128xf32>
    %29 = arith.truncf %28 : vector<16x128xf32> to vector<16x128xbf16>
    %c384 = arith.constant 384 : index
    %c0_20 = arith.constant 0 : index
    %30 = vector.load %arg3[%c384, %c0_20] : memref<640x128xbf16, #tpu.memory_space<vmem>>, vector<128x128xbf16>
    %cst_21 = arith.constant dense<0.000000e+00> : vector<16x128xf32>
    %31 = tpu.matmul %29, %30, %cst_21 {dimension_numbers = #tpu.dot_dimension_numbers<[1], [0], [0], [1], [0, 0, 1, 1], [], []>} : vector<16x128xbf16>, vector<128x128xbf16>, vector<16x128xf32> -> vector<16x128xf32>
    %32 = vector.extract_strided_slice %4 {offsets = [3, 0], sizes = [1, 128], strides = [1, 1]} : vector<8x256xf32> to vector<1x128xf32>
    %33 = vector.broadcast %32 : vector<1x128xf32> to vector<16x128xf32>
    %34 = arith.addf %31, %33 : vector<16x128xf32>
    %cst_22 = arith.constant 0.000000e+00 : f32
    %35 = vector.broadcast %cst_22 : f32 to vector<16x128xf32>
    %36 = arith.maximumf %34, %35 : vector<16x128xf32>
    %37 = arith.truncf %36 : vector<16x128xf32> to vector<16x128xbf16>
    %c512 = arith.constant 512 : index
    %c0_23 = arith.constant 0 : index
    %38 = vector.load %arg3[%c512, %c0_23] : memref<640x128xbf16, #tpu.memory_space<vmem>>, vector<128x128xbf16>
    %cst_24 = arith.constant dense<0.000000e+00> : vector<16x128xf32>
    %39 = tpu.matmul %37, %38, %cst_24 {dimension_numbers = #tpu.dot_dimension_numbers<[1], [0], [0], [1], [0, 0, 1, 1], [], []>} : vector<16x128xbf16>, vector<128x128xbf16>, vector<16x128xf32> -> vector<16x128xf32>
    %40 = vector.extract_strided_slice %4 {offsets = [4, 0], sizes = [1, 128], strides = [1, 1]} : vector<8x256xf32> to vector<1x128xf32>
    %41 = vector.broadcast %40 : vector<1x128xf32> to vector<16x128xf32>
    %42 = arith.addf %39, %41 : vector<16x128xf32>
    %c0_25 = arith.constant 0 : index
    %c0_26 = arith.constant 0 : index
    %43 = vector.load %arg5[%c0_25, %c0_26] : memref<16x128xf32, #tpu.memory_space<vmem>>, vector<16x128xf32>
    tpu.vector_store %arg5[%c0_25, %c0_26], %42 {strides = array<i32>} : memref<16x128xf32, #tpu.memory_space<vmem>>, vector<16x128xf32>,
    return
  }
  func.func @transform_0(%arg0: i32) -> (i32, i32) {
    %c0_i32 = arith.constant 0 : i32
    %c0_i32_0 = arith.constant 0 : i32
    return %arg0, %c0_i32 : i32, i32
  }
  func.func @transform_1(%arg0: i32) -> (i32, i32) {
    %c0_i32 = arith.constant 0 : i32
    %c0_i32_0 = arith.constant 0 : i32
    %c0_i32_1 = arith.constant 0 : i32
    return %c0_i32, %c0_i32_0 : i32, i32
  }
  func.func @transform_2(%arg0: i32) -> (i32, i32) {
    %c0_i32 = arith.constant 0 : i32
    %c0_i32_0 = arith.constant 0 : i32
    %c0_i32_1 = arith.constant 0 : i32
    return %c0_i32, %c0_i32_0 : i32, i32
  }
  func.func @transform_3(%arg0: i32) -> (i32, i32) {
    %c0_i32 = arith.constant 0 : i32
    %c0_i32_0 = arith.constant 0 : i32
    %c0_i32_1 = arith.constant 0 : i32
    return %c0_i32, %c0_i32_0 : i32, i32
  }
  func.func @transform_4(%arg0: i32) -> (i32, i32) {
    %c0_i32 = arith.constant 0 : i32
    %c0_i32_0 = arith.constant 0 : i32
    return %arg0, %c0_i32 : i32, i32
  }
}

</mosaic_0001>

<llo_original>
// kernel: qnetwork_forward.1
$region0: #{qnetwork_forward.1}
  #allocation0 [shape = 'u32[]', space=smem, size = 0x4, offset = 0x4, fixed_abs, tag = 'smem constant byte address 0x4 - core index']
  #allocation1 [shape = 'u32[144,128]{1,0:T(1,128)}', space=vmem, size = 0x12000, scoped, tag = 'internal scratch']
  #allocation2 [shape = 'bf16[16,128]{1,0:T(8,128)(2,1)}', space=vmem, size = 0x1000, scoped, tag = 'scratch operand']
  %s0 = inlined_call_operand.vmem [shape: bf16[16,37], index: 0, kind: input, shape index: {}]
  %s1 = inlined_call_operand.hbm [shape: bf16[128,256], index: 1, kind: input, shape index: {}]
  %s2 = inlined_call_operand.hbm [shape: bf16[640,128], index: 2, kind: input, shape index: {}]
  %s3 = inlined_call_operand.vmem [shape: f32[8,256], index: 3, kind: input, shape index: {}]
  %s4 = inlined_call_operand.vmem [shape: f32[16,128], index: 4, kind: output, shape index: {}]
  %s5 = sld [smem:[#allocation0]]
  $region34: #{qnetwork_forward.1} parent=0
    _
  %s7 = ssub.s32 1, %s5
  %s8 = scalar_select 0, %s7, %s5
  $region1: #{qnetwork_forward.1} parent=0
    #allocation3 [shape = 'u8[65536]{0}', space=vmem, size = 0x10000, scoped, tag = 'input window, operand 1, single buffered']
    #allocation4 [shape = 's32[1]{0}', space=sflag, size = 0x4, scoped, tag = 'scoped memory for qnetwork_forward.1']
    #allocation5 [shape = 'u8[163840]{0}', space=vmem, size = 0x28000, scoped, tag = 'input window, operand 2, single buffered']
    #allocation6 [shape = 's32[1]{0}', space=sflag, size = 0x4, scoped, tag = 'scoped memory for qnetwork_forward.1']
    %9 = vsyncpa [#allocation4], 0
    %10 = vsyncpa [#allocation6], 0
    // Predicated region
    $region2: #{qnetwork_forward.1} parent=1 // pred_check
      _
    $region3: #{qnetwork_forward.1} parent=1 // pred_check_branch
      %12 = sbr.rel (0) target = $region5
    $region4: #{qnetwork_forward.1} parent=1 // pred_region
      _
    $region5: #{qnetwork_forward.1} parent=1 // pred_fallthru
      _
    // Predicated region
    $region6: #{qnetwork_forward.1} parent=1 // pred_check
      _
    $region7: #{qnetwork_forward.1} parent=1 // pred_check_branch
      %14 = sbr.rel (0) target = $region9
    $region8: #{qnetwork_forward.1} parent=1 // pred_region
      %s16 = ssub.s32 2048, 2048
      %17 = vsyncadd [#allocation4], %s16
      %s18 = sshll.u32 [#allocation3], 4
      %s19 = int_to_ptr.vmem [resolvable:$true] %s18
      %24 = dma.hbm_to_vmem [thread:$0]  %s1, 2048, %s19, [#allocation4], 128, 128, 8
    $region9: #{qnetwork_forward.1} parent=1 // pred_fallthru
      _
    // Predicated region
    $region10: #{qnetwork_forward.1} parent=1 // pred_check
      _
    $region11: #{qnetwork_forward.1} parent=1 // pred_check_branch
      %26 = sbr.rel (0) target = $region13
    $region12: #{qnetwork_forward.1} parent=1 // pred_region
      %s28 = ssub.s32 5120, 5120
      %29 = vsyncadd [#allocation6], %s28
      %s30 = sshll.u32 [#allocation5], 4
      %s31 = int_to_ptr.vmem [resolvable:$true] %s30
      %36 = dma.hbm_to_vmem [thread:$0]  %s2, 5120, %s31, [#allocation6], 64, 64, 4
    $region13: #{qnetwork_forward.1} parent=1 // pred_fallthru
      _
    // Predicated region
    $region14: #{qnetwork_forward.1} parent=1 // pred_check
      _
    $region15: #{qnetwork_forward.1} parent=1 // pred_check_branch
      %38 = sbr.rel (0) target = $region17
    $region16: #{qnetwork_forward.1} parent=1 // pred_region
      _
    $region17: #{qnetwork_forward.1} parent=1 // pred_fallthru
      _
    // Predicated region
    $region18: #{qnetwork_forward.1} parent=1 // pred_check
      _
    $region19: #{qnetwork_forward.1} parent=1 // pred_check_branch
      %40 = sbr.rel (0) target = $region21
    $region20: #{qnetwork_forward.1} parent=1 // pred_region
      %41 = dma.done [#allocation4], 2048
    $region21: #{qnetwork_forward.1} parent=1 // pred_fallthru
      _
    // Predicated region
    $region22: #{qnetwork_forward.1} parent=1 // pred_check
      _
    $region23: #{qnetwork_forward.1} parent=1 // pred_check_branch
      %43 = sbr.rel (0) target = $region25
    $region24: #{qnetwork_forward.1} parent=1 // pred_region
      %44 = dma.done [#allocation6], 5120
    $region25: #{qnetwork_forward.1} parent=1 // pred_fallthru
      _
    %46 = vst [vmem:[#allocation2] sm:$0xf] 0
    %47 = vst [vmem:[#allocation2 + $0x4] sm:$0xf] 0
    %v48 = vld [vmem:[%s0] sm:$0xf]
    %v49 = vld [vmem:[%s0 + $0x4] sm:$0xf]
    %vm50 = vcmask 297984
    %51 = vst.msk [vmem:[#allocation2] sm:$0xf] %vm50, %v48
    %52 = vst.msk [vmem:[#allocation2 + $0x4] sm:$0xf] %vm50, %v49
    %v53 = vld [vmem:[%s3] sm:$0xff]
    %v54 = vld [vmem:[%s3 + $0x8] sm:$0xff]
    %v55 = vld [vmem:[#allocation2] sm:$0xf]
    %v56 = vld [vmem:[#allocation2 + $0x4] sm:$0xf]
    %v57 = vld [vmem:[#allocation3] sm:$0xff]
    %v58 = vld [vmem:[#allocation3 + $0x8] sm:$0xff]
    %v59 = vld [vmem:[#allocation3 + $0x10] sm:$0xff]
    %v60 = vld [vmem:[#allocation3 + $0x18] sm:$0xff]
    %v61 = vld [vmem:[#allocation3 + $0x20] sm:$0xff]
    %v62 = vld [vmem:[#allocation3 + $0x28] sm:$0xff]
    %v63 = vld [vmem:[#allocation3 + $0x30] sm:$0xff]
    %v64 = vld [vmem:[#allocation3 + $0x38] sm:$0xff]
    %v65 = vld [vmem:[#allocation3 + $0x40] sm:$0xff]
    %v66 = vld [vmem:[#allocation3 + $0x48] sm:$0xff]
    %v67 = vld [vmem:[#allocation3 + $0x50] sm:$0xff]
    %v68 = vld [vmem:[#allocation3 + $0x58] sm:$0xff]
    %v69 = vld [vmem:[#allocation3 + $0x60] sm:$0xff]
    %v70 = vld [vmem:[#allocation3 + $0x68] sm:$0xff]
    %v71 = vld [vmem:[#allocation3 + $0x70] sm:$0xff]
    %v72 = vld [vmem:[#allocation3 + $0x78] sm:$0xff]
    %v73 = vlaneseq
    %v74 = vshrl.u32 %v73, 7
    %v75 = vsub.s32 0, %v74
    %v76 = vrot.slane %v53, %v75
    %v77 = vlaneseq
    %v78 = vshrl.u32 %v77, 7
    %v79 = vsub.s32 0, %v78
    %v80 = vrot.slane %v54, %v79
    %v83 = vunpack.c.l.b16 %v55
    %v84 = vunpack.c.l.b16 %v56
    %v85 = vpack.c.b16 %v84, %v83
    %v103 = vunpack.c.l.b16 %v57
    %v104 = vunpack.c.h.b16 %v57
    %v105 = vunpack.c.l.b16 %v58
    %v106 = vunpack.c.h.b16 %v58
    %v107 = vunpack.c.l.b16 %v59
    %v108 = vunpack.c.h.b16 %v59
    %v109 = vunpack.c.l.b16 %v60
    %v110 = vunpack.c.h.b16 %v60
    %v111 = vunpack.c.l.b16 %v61
    %v112 = vunpack.c.h.b16 %v61
    %v113 = vunpack.c.l.b16 %v62
    %v114 = vunpack.c.h.b16 %v62
    %v115 = vunpack.c.l.b16 %v63
    %v116 = vunpack.c.h.b16 %v63
    %v117 = vunpack.c.l.b16 %v64
    %v118 = vunpack.c.h.b16 %v64
    %v119 = vunpack.c.l.b16 %v65
    %v120 = vunpack.c.h.b16 %v65
    %v121 = vunpack.c.l.b16 %v66
    %v122 = vunpack.c.h.b16 %v66
    %v123 = vunpack.c.l.b16 %v67
    %v124 = vunpack.c.h.b16 %v67
    %v125 = vunpack.c.l.b16 %v68
    %v126 = vunpack.c.h.b16 %v68
    %v127 = vunpack.c.l.b16 %v69
    %v128 = vunpack.c.h.b16 %v69
    %v129 = vunpack.c.l.b16 %v70
    %v130 = vunpack.c.h.b16 %v70
    %v131 = vunpack.c.l.b16 %v71
    %v132 = vunpack.c.h.b16 %v71
    %v133 = vunpack.c.l.b16 %v72
    %v134 = vunpack.c.h.b16 %v72
    %v135 = vpack.c.b16 %v105, %v103
    %v136 = vpack.c.b16 %v106, %v104
    %v137 = vpack.c.b16 %v109, %v107
    %v138 = vpack.c.b16 %v110, %v108
    %v139 = vpack.c.b16 %v113, %v111
    %v140 = vpack.c.b16 %v114, %v112
    %v141 = vpack.c.b16 %v117, %v115
    %v142 = vpack.c.b16 %v118, %v116
    %v143 = vpack.c.b16 %v121, %v119
    %v144 = vpack.c.b16 %v122, %v120
    %v145 = vpack.c.b16 %v125, %v123
    %v146 = vpack.c.b16 %v126, %v124
    %v147 = vpack.c.b16 %v129, %v127
    %v148 = vpack.c.b16 %v130, %v128
    %v149 = vpack.c.b16 %v133, %v131
    %v150 = vpack.c.b16 %v134, %v132
    %167 = vmatprep.subr.bf16.mxu0 %v150
    %168 = vmatpush1.bf16.msra.mxu0 %v149
    %169 = vmatprep.subr.bf16.mxu0 %v148
    %170 = vmatpush1.bf16.msra.mxu0 %v147
    %171 = vmatprep.subr.bf16.mxu0 %v146
    %172 = vmatpush1.bf16.msra.mxu0 %v145
    %173 = vmatprep.subr.bf16.mxu0 %v144
    %174 = vmatpush1.bf16.msra.mxu0 %v143
    %175 = vmatprep.subr.bf16.mxu0 %v142
    %176 = vmatpush1.bf16.msra.mxu0 %v141
    %177 = vmatprep.subr.bf16.mxu0 %v140
    %178 = vmatpush1.bf16.msra.mxu0 %v139
    %179 = vmatprep.subr.bf16.mxu0 %v138
    %180 = vmatpush1.bf16.msra.mxu0 %v137
    %181 = vmatprep.subr.bf16.mxu0 %v136
    %182 = vmatpush1.bf16.msra.mxu0 %v135
    %183 = vmatprep.subr.bf16.mxu0 0
    %184 = vmatpush2.bf16.msra.mxu0 0
    %185 = vmatprep.subr.bf16.mxu0 0
    %186 = vmatpush2.bf16.msra.mxu0 0
    %187 = vmatprep.subr.bf16.mxu0 0
    %188 = vmatpush2.bf16.msra.mxu0 0
    %189 = vmatprep.subr.bf16.mxu0 0
    %190 = vmatpush2.bf16.msra.mxu0 0
    %191 = vmatprep.subr.bf16.mxu0 0
    %192 = vmatpush2.bf16.msra.mxu0 0
    %193 = vmatprep.subr.bf16.mxu0 0
    %194 = vmatpush2.bf16.msra.mxu0 0
    %195 = vmatprep.subr.bf16.mxu0 0
    %196 = vmatpush2.bf16.msra.mxu0 0
    %197 = vmatprep.subr.bf16.mxu0 0
    %198 = vmatpush2.bf16.msra.mxu0 0
    %199 = vmatprep.mubr.bf16.mxu0 0
    %200 = vmatmul.mubr.bf16.gmra.mxu0 %v85
    %v201 = vpop.f32.mrf.mxu0
    %v202 = vadd.f32 %v76, %v201
    %v203 = vpop.f32.mrf.mxu0
    %v204 = vadd.f32 %v80, %v203
    %v205 = vpop.f32.mrf.mxu0
    %v206 = vadd.f32 %v76, %v205
    %v207 = vpop.f32.mrf.mxu0
    %v208 = vadd.f32 %v80, %v207
    %209 = vdwg.mxu0
    %v210 = vmax.f32 %v202, 0.0
    %v211 = vmax.f32 %v204, 0.0
    %v212 = vmax.f32 %v206, 0.0
    %v213 = vmax.f32 %v208, 0.0
    %v214 = vpack.c.bf16 %v212, %v210
    %v215 = vpack.c.bf16 %v213, %v211
    %v216 = vld [vmem:[#allocation5] sm:$0xf]
    %v217 = vld [vmem:[#allocation5 + $0x4] sm:$0xf]
    %v218 = vld [vmem:[#allocation5 + $0x8] sm:$0xf]
    %v219 = vld [vmem:[#allocation5 + $0xc] sm:$0xf]
    %v220 = vld [vmem:[#allocation5 + $0x10] sm:$0xf]
    %v221 = vld [vmem:[#allocation5 + $0x14] sm:$0xf]
    %v222 = vld [vmem:[#allocation5 + $0x18] sm:$0xf]
    %v223 = vld [vmem:[#allocation5 + $0x1c] sm:$0xf]
    %v224 = vld [vmem:[#allocation5 + $0x20] sm:$0xf]
    %v225 = vld [vmem:[#allocation5 + $0x24] sm:$0xf]
    %v226 = vld [vmem:[#allocation5 + $0x28] sm:$0xf]
    %v227 = vld [vmem:[#allocation5 + $0x2c] sm:$0xf]
    %v228 = vld [vmem:[#allocation5 + $0x30] sm:$0xf]
    %v229 = vld [vmem:[#allocation5 + $0x34] sm:$0xf]
    %v230 = vld [vmem:[#allocation5 + $0x38] sm:$0xf]
    %v231 = vld [vmem:[#allocation5 + $0x3c] sm:$0xf]
    %v232 = vld [vmem:[#allocation5 + $0x40] sm:$0xf]
    %v233 = vld [vmem:[#allocation5 + $0x44] sm:$0xf]
    %v234 = vld [vmem:[#allocation5 + $0x48] sm:$0xf]
    %v235 = vld [vmem:[#allocation5 + $0x4c] sm:$0xf]
    %v236 = vld [vmem:[#allocation5 + $0x50] sm:$0xf]
    %v237 = vld [vmem:[#allocation5 + $0x54] sm:$0xf]
    %v238 = vld [vmem:[#allocation5 + $0x58] sm:$0xf]
    %v239 = vld [vmem:[#allocation5 + $0x5c] sm:$0xf]
    %v240 = vld [vmem:[#allocation5 + $0x60] sm:$0xf]
    %v241 = vld [vmem:[#allocation5 + $0x64] sm:$0xf]
    %v242 = vld [vmem:[#allocation5 + $0x68] sm:$0xf]
    %v243 = vld [vmem:[#allocation5 + $0x6c] sm:$0xf]
    %v244 = vld [vmem:[#allocation5 + $0x70] sm:$0xf]
    %v245 = vld [vmem:[#allocation5 + $0x74] sm:$0xf]
    %v246 = vld [vmem:[#allocation5 + $0x78] sm:$0xf]
    %v247 = vld [vmem:[#allocation5 + $0x7c] sm:$0xf]
    %v248 = vlaneseq
    %v249 = vshrl.u32 %v248, 7
    %v250 = vsub.s32 1, %v249
    %v251 = vrot.slane %v53, %v250
    %v284 = vunpack.c.l.b16 %v216
    %v285 = vunpack.c.l.b16 %v217
    %v286 = vunpack.c.l.b16 %v218
    %v287 = vunpack.c.l.b16 %v219
    %v288 = vunpack.c.l.b16 %v220
    %v289 = vunpack.c.l.b16 %v221
    %v290 = vunpack.c.l.b16 %v222
    %v291 = vunpack.c.l.b16 %v223
    %v292 = vunpack.c.l.b16 %v224
    %v293 = vunpack.c.l.b16 %v225
    %v294 = vunpack.c.l.b16 %v226
    %v295 = vunpack.c.l.b16 %v227
    %v296 = vunpack.c.l.b16 %v228
    %v297 = vunpack.c.l.b16 %v229
    %v298 = vunpack.c.l.b16 %v230
    %v299 = vunpack.c.l.b16 %v231
    %v300 = vunpack.c.l.b16 %v232
    %v301 = vunpack.c.l.b16 %v233
    %v302 = vunpack.c.l.b16 %v234
    %v303 = vunpack.c.l.b16 %v235
    %v304 = vunpack.c.l.b16 %v236
    %v305 = vunpack.c.l.b16 %v237
    %v306 = vunpack.c.l.b16 %v238
    %v307 = vunpack.c.l.b16 %v239
    %v308 = vunpack.c.l.b16 %v240
    %v309 = vunpack.c.l.b16 %v241
    %v310 = vunpack.c.l.b16 %v242
    %v311 = vunpack.c.l.b16 %v243
    %v312 = vunpack.c.l.b16 %v244
    %v313 = vunpack.c.l.b16 %v245
    %v314 = vunpack.c.l.b16 %v246
    %v315 = vunpack.c.l.b16 %v247
    %v316 = vpack.c.b16 %v285, %v284
    %v317 = vpack.c.b16 %v287, %v286
    %v318 = vpack.c.b16 %v289, %v288
    %v319 = vpack.c.b16 %v291, %v290
    %v320 = vpack.c.b16 %v293, %v292
    %v321 = vpack.c.b16 %v295, %v294
    %v322 = vpack.c.b16 %v297, %v296
    %v323 = vpack.c.b16 %v299, %v298
    %v324 = vpack.c.b16 %v301, %v300
    %v325 = vpack.c.b16 %v303, %v302
    %v326 = vpack.c.b16 %v305, %v304
    %v327 = vpack.c.b16 %v307, %v306
    %v328 = vpack.c.b16 %v309, %v308
    %v329 = vpack.c.b16 %v311, %v310
    %v330 = vpack.c.b16 %v313, %v312
    %v331 = vpack.c.b16 %v315, %v314
    %348 = vmatprep.subr.bf16.mxu0 0
    %349 = vmatpush1.bf16.msra.mxu0 %v323
    %350 = vmatprep.subr.bf16.mxu0 0
    %351 = vmatpush1.bf16.msra.mxu0 %v322
    %352 = vmatprep.subr.bf16.mxu0 0
    %353 = vmatpush1.bf16.msra.mxu0 %v321
    %354 = vmatprep.subr.bf16.mxu0 0
    %355 = vmatpush1.bf16.msra.mxu0 %v320
    %356 = vmatprep.subr.bf16.mxu0 0
    %357 = vmatpush1.bf16.msra.mxu0 %v319
    %358 = vmatprep.subr.bf16.mxu0 0
    %359 = vmatpush1.bf16.msra.mxu0 %v318
    %360 = vmatprep.subr.bf16.mxu0 0
    %361 = vmatpush1.bf16.msra.mxu0 %v317
    %362 = vmatprep.subr.bf16.mxu0 0
    %363 = vmatpush1.bf16.msra.mxu0 %v316
    %364 = vmatprep.subr.bf16.mxu0 0
    %365 = vmatpush2.bf16.msra.mxu0 %v331
    %366 = vmatprep.subr.bf16.mxu0 0
    %367 = vmatpush2.bf16.msra.mxu0 %v330
    %368 = vmatprep.subr.bf16.mxu0 0
    %369 = vmatpush2.bf16.msra.mxu0 %v329
    %370 = vmatprep.subr.bf16.mxu0 0
    %371 = vmatpush2.bf16.msra.mxu0 %v328
    %372 = vmatprep.subr.bf16.mxu0 0
    %373 = vmatpush2.bf16.msra.mxu0 %v327
    %374 = vmatprep.subr.bf16.mxu0 0
    %375 = vmatpush2.bf16.msra.mxu0 %v326
    %376 = vmatprep.subr.bf16.mxu0 0
    %377 = vmatpush2.bf16.msra.mxu0 %v325
    %378 = vmatprep.subr.bf16.mxu0 0
    %379 = vmatpush2.bf16.msra.mxu0 %v324
    %380 = vmatprep.mubr.bf16.mxu0 %v215
    %381 = vmatmul.mubr.bf16.gmra.mxu0 %v214
    %v382 = vpop.f32.mrf.mxu0
    %v383 = vadd.f32 %v251, %v382
    %v384 = vpop.f32.mrf.mxu0
    %v385 = vpop.f32.mrf.mxu0
    %v386 = vadd.f32 %v251, %v385
    %v387 = vpop.f32.mrf.mxu0
    %388 = vdwg.mxu0
    %v389 = vmax.f32 %v383, 0.0
    %v390 = vmax.f32 %v386, 0.0
    %v391 = vpack.c.bf16 %v390, %v389
    %v392 = vld [vmem:[#allocation5 + $0x80] sm:$0xf]
    %v393 = vld [vmem:[#allocation5 + $0x84] sm:$0xf]
    %v394 = vld [vmem:[#allocation5 + $0x88] sm:$0xf]
    %v395 = vld [vmem:[#allocation5 + $0x8c] sm:$0xf]
    %v396 = vld [vmem:[#allocation5 + $0x90] sm:$0xf]
    %v397 = vld [vmem:[#allocation5 + $0x94] sm:$0xf]
    %v398 = vld [vmem:[#allocation5 + $0x98] sm:$0xf]
    %v399 = vld [vmem:[#allocation5 + $0x9c] sm:$0xf]
    %v400 = vld [vmem:[#allocation5 + $0xa0] sm:$0xf]
    %v401 = vld [vmem:[#allocation5 + $0xa4] sm:$0xf]
    %v402 = vld [vmem:[#allocation5 + $0xa8] sm:$0xf]
    %v403 = vld [vmem:[#allocation5 + $0xac] sm:$0xf]
    %v404 = vld [vmem:[#allocation5 + $0xb0] sm:$0xf]
    %v405 = vld [vmem:[#allocation5 + $0xb4] sm:$0xf]
    %v406 = vld [vmem:[#allocation5 + $0xb8] sm:$0xf]
    %v407 = vld [vmem:[#allocation5 + $0xbc] sm:$0xf]
    %v408 = vlaneseq
    %v409 = vshrl.u32 %v408, 7
    %v410 = vsub.s32 2, %v409
    %v411 = vrot.slane %v53, %v410
    %v428 = vunpack.c.l.b16 %v392
    %v429 = vunpack.c.l.b16 %v393
    %v430 = vunpack.c.l.b16 %v394
    %v431 = vunpack.c.l.b16 %v395
    %v432 = vunpack.c.l.b16 %v396
    %v433 = vunpack.c.l.b16 %v397
    %v434 = vunpack.c.l.b16 %v398
    %v435 = vunpack.c.l.b16 %v399
    %v436 = vunpack.c.l.b16 %v400
    %v437 = vunpack.c.l.b16 %v401
    %v438 = vunpack.c.l.b16 %v402
    %v439 = vunpack.c.l.b16 %v403
    %v440 = vunpack.c.l.b16 %v404
    %v441 = vunpack.c.l.b16 %v405
    %v442 = vunpack.c.l.b16 %v406
    %v443 = vunpack.c.l.b16 %v407
    %v444 = vpack.c.b16 %v429, %v428
    %v445 = vpack.c.b16 %v431, %v430
    %v446 = vpack.c.b16 %v433, %v432
    %v447 = vpack.c.b16 %v435, %v434
    %v448 = vpack.c.b16 %v437, %v436
    %v449 = vpack.c.b16 %v439, %v438
    %v450 = vpack.c.b16 %v441, %v440
    %v451 = vpack.c.b16 %v443, %v442
    %460 = vmatprep.subr.bf16.mxu0 0
    %461 = vmatpush1.bf16.msra.mxu0 %v451
    %462 = vmatprep.subr.bf16.mxu0 0
    %463 = vmatpush1.bf16.msra.mxu0 %v450
    %464 = vmatprep.subr.bf16.mxu0 0
    %465 = vmatpush1.bf16.msra.mxu0 %v449
    %466 = vmatprep.subr.bf16.mxu0 0
    %467 = vmatpush1.bf16.msra.mxu0 %v448
    %468 = vmatprep.subr.bf16.mxu0 0
    %469 = vmatpush1.bf16.msra.mxu0 %v447
    %470 = vmatprep.subr.bf16.mxu0 0
    %471 = vmatpush1.bf16.msra.mxu0 %v446
    %472 = vmatprep.subr.bf16.mxu0 0
    %473 = vmatpush1.bf16.msra.mxu0 %v445
    %474 = vmatprep.subr.bf16.mxu0 0
    %475 = vmatpush1.bf16.msra.mxu0 %v444
    %476 = vmatprep.subr.bf16.mxu0 0
    %477 = vmatpush2.bf16.msra.mxu0 0
    %478 = vmatprep.subr.bf16.mxu0 0
    %479 = vmatpush2.bf16.msra.mxu0 0
    %480 = vmatprep.subr.bf16.mxu0 0
    %481 = vmatpush2.bf16.msra.mxu0 0
    %482 = vmatprep.subr.bf16.mxu0 0
    %483 = vmatpush2.bf16.msra.mxu0 0
    %484 = vmatprep.subr.bf16.mxu0 0
    %485 = vmatpush2.bf16.msra.mxu0 0
    %486 = vmatprep.subr.bf16.mxu0 0
    %487 = vmatpush2.bf16.msra.mxu0 0
    %488 = vmatprep.subr.bf16.mxu0 0
    %489 = vmatpush2.bf16.msra.mxu0 0
    %490 = vmatprep.subr.bf16.mxu0 0
    %491 = vmatpush2.bf16.msra.mxu0 0
    %492 = vmatprep.mubr.bf16.mxu0 0
    %493 = vmatmul.mubr.bf16.gmra.mxu0 %v391
    %v494 = vpop.f32.mrf.mxu0
    %v495 = vadd.f32 %v411, %v494
    %v496 = vpop.f32.mrf.mxu0
    %v497 = vpop.f32.mrf.mxu0
    %v498 = vadd.f32 %v411, %v497
    %v499 = vpop.f32.mrf.mxu0
    %500 = vdwg.mxu0
    %v501 = vmax.f32 %v495, 0.0
    %v502 = vmax.f32 %v498, 0.0
    %v503 = vpack.c.bf16 %v502, %v501
    %v504 = vld [vmem:[#allocation5 + $0xc0] sm:$0xf]
    %v505 = vld [vmem:[#allocation5 + $0xc4] sm:$0xf]
    %v506 = vld [vmem:[#allocation5 + $0xc8] sm:$0xf]
    %v507 = vld [vmem:[#allocation5 + $0xcc] sm:$0xf]
    %v508 = vld [vmem:[#allocation5 + $0xd0] sm:$0xf]
    %v509 = vld [vmem:[#allocation5 + $0xd4] sm:$0xf]
    %v510 = vld [vmem:[#allocation5 + $0xd8] sm:$0xf]
    %v511 = vld [vmem:[#allocation5 + $0xdc] sm:$0xf]
    %v512 = vld [vmem:[#allocation5 + $0xe0] sm:$0xf]
    %v513 = vld [vmem:[#allocation5 + $0xe4] sm:$0xf]
    %v514 = vld [vmem:[#allocation5 + $0xe8] sm:$0xf]
    %v515 = vld [vmem:[#allocation5 + $0xec] sm:$0xf]
    %v516 = vld [vmem:[#allocation5 + $0xf0] sm:$0xf]
    %v517 = vld [vmem:[#allocation5 + $0xf4] sm:$0xf]
    %v518 = vld [vmem:[#allocation5 + $0xf8] sm:$0xf]
    %v519 = vld [vmem:[#allocation5 + $0xfc] sm:$0xf]
    %v520 = vlaneseq
    %v521 = vshrl.u32 %v520, 7
    %v522 = vsub.s32 3, %v521
    %v523 = vrot.slane %v53, %v522
    %v540 = vunpack.c.l.b16 %v504
    %v541 = vunpack.c.l.b16 %v505
    %v542 = vunpack.c.l.b16 %v506
    %v543 = vunpack.c.l.b16 %v507
    %v544 = vunpack.c.l.b16 %v508
    %v545 = vunpack.c.l.b16 %v509
    %v546 = vunpack.c.l.b16 %v510
    %v547 = vunpack.c.l.b16 %v511
    %v548 = vunpack.c.l.b16 %v512
    %v549 = vunpack.c.l.b16 %v513
    %v550 = vunpack.c.l.b16 %v514
    %v551 = vunpack.c.l.b16 %v515
    %v552 = vunpack.c.l.b16 %v516
    %v553 = vunpack.c.l.b16 %v517
    %v554 = vunpack.c.l.b16 %v518
    %v555 = vunpack.c.l.b16 %v519
    %v556 = vpack.c.b16 %v541, %v540
    %v557 = vpack.c.b16 %v543, %v542
    %v558 = vpack.c.b16 %v545, %v544
    %v559 = vpack.c.b16 %v547, %v546
    %v560 = vpack.c.b16 %v549, %v548
    %v561 = vpack.c.b16 %v551, %v550
    %v562 = vpack.c.b16 %v553, %v552
    %v563 = vpack.c.b16 %v555, %v554
    %572 = vmatprep.subr.bf16.mxu0 0
    %573 = vmatpush1.bf16.msra.mxu0 %v563
    %574 = vmatprep.subr.bf16.mxu0 0
    %575 = vmatpush1.bf16.msra.mxu0 %v562
    %576 = vmatprep.subr.bf16.mxu0 0
    %577 = vmatpush1.bf16.msra.mxu0 %v561
    %578 = vmatprep.subr.bf16.mxu0 0
    %579 = vmatpush1.bf16.msra.mxu0 %v560
    %580 = vmatprep.subr.bf16.mxu0 0
    %581 = vmatpush1.bf16.msra.mxu0 %v559
    %582 = vmatprep.subr.bf16.mxu0 0
    %583 = vmatpush1.bf16.msra.mxu0 %v558
    %584 = vmatprep.subr.bf16.mxu0 0
    %585 = vmatpush1.bf16.msra.mxu0 %v557
    %586 = vmatprep.subr.bf16.mxu0 0
    %587 = vmatpush1.bf16.msra.mxu0 %v556
    %588 = vmatprep.subr.bf16.mxu0 0
    %589 = vmatpush2.bf16.msra.mxu0 0
    %590 = vmatprep.subr.bf16.mxu0 0
    %591 = vmatpush2.bf16.msra.mxu0 0
    %592 = vmatprep.subr.bf16.mxu0 0
    %593 = vmatpush2.bf16.msra.mxu0 0
    %594 = vmatprep.subr.bf16.mxu0 0
    %595 = vmatpush2.bf16.msra.mxu0 0
    %596 = vmatprep.subr.bf16.mxu0 0
    %597 = vmatpush2.bf16.msra.mxu0 0
    %598 = vmatprep.subr.bf16.mxu0 0
    %599 = vmatpush2.bf16.msra.mxu0 0
    %600 = vmatprep.subr.bf16.mxu0 0
    %601 = vmatpush2.bf16.msra.mxu0 0
    %602 = vmatprep.subr.bf16.mxu0 0
    %603 = vmatpush2.bf16.msra.mxu0 0
    %604 = vmatprep.mubr.bf16.mxu0 0
    %605 = vmatmul.mubr.bf16.gmra.mxu0 %v503
    %v606 = vpop.f32.mrf.mxu0
    %v607 = vadd.f32 %v523, %v606
    %v608 = vpop.f32.mrf.mxu0
    %v609 = vpop.f32.mrf.mxu0
    %v610 = vadd.f32 %v523, %v609
    %v611 = vpop.f32.mrf.mxu0
    %612 = vdwg.mxu0
    %v613 = vmax.f32 %v607, 0.0
    %v614 = vmax.f32 %v610, 0.0
    %v615 = vpack.c.bf16 %v614, %v613
    %v616 = vld [vmem:[#allocation5 + $0x100] sm:$0xf]
    %v617 = vld [vmem:[#allocation5 + $0x104] sm:$0xf]
    %v618 = vld [vmem:[#allocation5 + $0x108] sm:$0xf]
    %v619 = vld [vmem:[#allocation5 + $0x10c] sm:$0xf]
    %v620 = vld [vmem:[#allocation5 + $0x110] sm:$0xf]
    %v621 = vld [vmem:[#allocation5 + $0x114] sm:$0xf]
    %v622 = vld [vmem:[#allocation5 + $0x118] sm:$0xf]
    %v623 = vld [vmem:[#allocation5 + $0x11c] sm:$0xf]
    %v624 = vld [vmem:[#allocation5 + $0x120] sm:$0xf]
    %v625 = vld [vmem:[#allocation5 + $0x124] sm:$0xf]
    %v626 = vld [vmem:[#allocation5 + $0x128] sm:$0xf]
    %v627 = vld [vmem:[#allocation5 + $0x12c] sm:$0xf]
    %v628 = vld [vmem:[#allocation5 + $0x130] sm:$0xf]
    %v629 = vld [vmem:[#allocation5 + $0x134] sm:$0xf]
    %v630 = vld [vmem:[#allocation5 + $0x138] sm:$0xf]
    %v631 = vld [vmem:[#allocation5 + $0x13c] sm:$0xf]
    %v632 = vlaneseq
    %v633 = vshrl.u32 %v632, 7
    %v634 = vsub.s32 4, %v633
    %v635 = vrot.slane %v53, %v634
    %v652 = vunpack.c.l.b16 %v616
    %v653 = vunpack.c.l.b16 %v617
    %v654 = vunpack.c.l.b16 %v618
    %v655 = vunpack.c.l.b16 %v619
    %v656 = vunpack.c.l.b16 %v620
    %v657 = vunpack.c.l.b16 %v621
    %v658 = vunpack.c.l.b16 %v622
    %v659 = vunpack.c.l.b16 %v623
    %v660 = vunpack.c.l.b16 %v624
    %v661 = vunpack.c.l.b16 %v625
    %v662 = vunpack.c.l.b16 %v626
    %v663 = vunpack.c.l.b16 %v627
    %v664 = vunpack.c.l.b16 %v628
    %v665 = vunpack.c.l.b16 %v629
    %v666 = vunpack.c.l.b16 %v630
    %v667 = vunpack.c.l.b16 %v631
    %v668 = vpack.c.b16 %v653, %v652
    %v669 = vpack.c.b16 %v655, %v654
    %v670 = vpack.c.b16 %v657, %v656
    %v671 = vpack.c.b16 %v659, %v658
    %v672 = vpack.c.b16 %v661, %v660
    %v673 = vpack.c.b16 %v663, %v662
    %v674 = vpack.c.b16 %v665, %v664
    %v675 = vpack.c.b16 %v667, %v666
    %684 = vmatprep.subr.bf16.mxu0 0
    %685 = vmatpush1.bf16.msra.mxu0 %v675
    %686 = vmatprep.subr.bf16.mxu0 0
    %687 = vmatpush1.bf16.msra.mxu0 %v674
    %688 = vmatprep.subr.bf16.mxu0 0
    %689 = vmatpush1.bf16.msra.mxu0 %v673
    %690 = vmatprep.subr.bf16.mxu0 0
    %691 = vmatpush1.bf16.msra.mxu0 %v672
    %692 = vmatprep.subr.bf16.mxu0 0
    %693 = vmatpush1.bf16.msra.mxu0 %v671
    %694 = vmatprep.subr.bf16.mxu0 0
    %695 = vmatpush1.bf16.msra.mxu0 %v670
    %696 = vmatprep.subr.bf16.mxu0 0
    %697 = vmatpush1.bf16.msra.mxu0 %v669
    %698 = vmatprep.subr.bf16.mxu0 0
    %699 = vmatpush1.bf16.msra.mxu0 %v668
    %700 = vmatprep.subr.bf16.mxu0 0
    %701 = vmatpush2.bf16.msra.mxu0 0
    %702 = vmatprep.subr.bf16.mxu0 0
    %703 = vmatpush2.bf16.msra.mxu0 0
    %704 = vmatprep.subr.bf16.mxu0 0
    %705 = vmatpush2.bf16.msra.mxu0 0
    %706 = vmatprep.subr.bf16.mxu0 0
    %707 = vmatpush2.bf16.msra.mxu0 0
    %708 = vmatprep.subr.bf16.mxu0 0
    %709 = vmatpush2.bf16.msra.mxu0 0
    %710 = vmatprep.subr.bf16.mxu0 0
    %711 = vmatpush2.bf16.msra.mxu0 0
    %712 = vmatprep.subr.bf16.mxu0 0
    %713 = vmatpush2.bf16.msra.mxu0 0
    %714 = vmatprep.subr.bf16.mxu0 0
    %715 = vmatpush2.bf16.msra.mxu0 0
    %716 = vmatprep.mubr.bf16.mxu0 0
    %717 = vmatmul.mubr.bf16.gmra.mxu0 %v615
    %v718 = vpop.f32.mrf.mxu0
    %v719 = vadd.f32 %v635, %v718
    %v720 = vpop.f32.mrf.mxu0
    %v721 = vpop.f32.mrf.mxu0
    %v722 = vadd.f32 %v635, %v721
    %v723 = vpop.f32.mrf.mxu0
    %724 = vdwg.mxu0
    %725 = vst [vmem:[%s4] sm:$0xff] %v719
    %726 = vst [vmem:[%s4 + $0x8] sm:$0xff] %v722
    // Predicated region
    $region26: #{qnetwork_forward.1} parent=1 // pred_check
      _
    $region27: #{qnetwork_forward.1} parent=1 // pred_check_branch
      %728 = sbr.rel (0) target = $region29
    $region28: #{qnetwork_forward.1} parent=1 // pred_region
      _
    $region29: #{qnetwork_forward.1} parent=1 // pred_fallthru
      _
    // Predicated region
    $region30: #{qnetwork_forward.1} parent=1 // pred_check
      _
    $region31: #{qnetwork_forward.1} parent=1 // pred_check_branch
      %730 = sbr.rel (0) target = $region33
    $region32: #{qnetwork_forward.1} parent=1 // pred_region
      _
    $region33: #{qnetwork_forward.1} parent=1 // pred_fallthru
      _
    %731 = vsyncpa [#allocation4], 1
    %732 = vsyncpa [#allocation6], 1

</llo_original>
